<compile_context>
chip_gen: v7x
topology: tpu7x:2x2x1
jax: 0.10.0
libtpu: 0.0.40
codegen_flags: <defaults>
</compile_context>

<pallas_src>
import numpy as np
import jax
import jax.numpy as jnp
from jax.experimental import pallas as pl
from jax.experimental.pallas import tpu as pltpu


def _round_up(a, b):
    return ((a + b - 1) // b) * b


def _embedding_head_kernel(x_ref, g_ref, w_ref, b_ref, e_ref, out_ref):
    # x_ref: (TM, input_dim), g_ref: (TM, K), w_ref: (input_dim, K)
    # b_ref: (1, K), e_ref: (K, ED), out_ref: (TM, ED)
    x = x_ref[...]

    # Fused fc[0] + fc[1]: one Linear(input_dim, K) with pre-composed weights.
    h = jnp.dot(x, w_ref[...], preferred_element_type=jnp.float32) + b_ref[...]

    # fc[2]: Softplus, numerically stable form using only basic Mosaic ops.
    c = jnp.maximum(h, 0.0) + jnp.log(1.0 + jnp.exp(-jnp.abs(h)))

    # gumbel_softmax(tau=1, hard=False, dim=-1): softmax(c + gumbel).
    logits = c + g_ref[...].astype(jnp.float32)
    logits = logits - jnp.max(logits, axis=-1, keepdims=True)
    p = jnp.exp(logits)
    d = p / jnp.sum(p, axis=-1, keepdims=True)          # exact normalization

    # Embedd = D @ E.
    out = jnp.dot(d.astype(e_ref.dtype), e_ref[...],
                  preferred_element_type=jnp.float32)
    out_ref[...] = out.astype(out_ref.dtype)


def embedding_head_forward(x, gumbel, w1, b1, w2, b2, E, nodes_num, *,
                           tm_max=1024, use_bf16=True, out_dtype=jnp.float32,
                           jax_fallback=False):
    """x: any shape viewable as (B, nodes_num, input_dim); gumbel: (B, nodes_num, K)."""
    B = x.shape[0]
    x2 = x.reshape(B, nodes_num, -1)                    # x.view(B, nodes_num, -1)
    input_dim = x2.shape[-1]
    K, embedding_dim = E.shape

    # Fuse Linear(input_dim, K) o Linear(K, K) into a single linear map.
    w12 = (w1 @ w2).astype(jnp.float32)                 # (input_dim, K)
    b12 = (b1 @ w2 + b2).astype(jnp.float32)            # (K,)

    if jax_fallback:
        # Tiny problems: pallas launch + per-step overhead dominates; use XLA.
        h = x2.astype(jnp.float32) @ w12 + b12
        c = jax.nn.softplus(h)
        d = jax.nn.softmax(c + gumbel.reshape(B, nodes_num, K).astype(jnp.float32), -1)
        return (d @ E.astype(jnp.float32)).astype(out_dtype)

    # Output layout: full-width (unpadded) block unless embedding_dim is large
    # and ragged w.r.t. the 128-lane register width.
    if embedding_dim >= 128 and embedding_dim % 128 != 0:
        ed_out = _round_up(embedding_dim, 128)
        E_used = jnp.zeros((K, ed_out), E.dtype).at[:, :embedding_dim].set(E)
    else:
        ed_out = embedding_dim
        E_used = E

    mxu_dtype = jnp.bfloat16 if use_bf16 else jnp.float32
    M = B * nodes_num
    x_in = x2.reshape(M, input_dim).astype(mxu_dtype)
    g_in = gumbel.reshape(M, K)                         # cast to f32 inside kernel
    w_in = w12.astype(mxu_dtype)
    e_in = E_used.astype(mxu_dtype)
    b_in = b12.reshape(1, K)

    # Row tile: VMEM-budgeted, balanced across the grid, and >= 2 blocks when M
    # allows so v7x's two TensorCores can split the ("parallel",) grid axis.
    per_row_bytes = 2 * (input_dim * x_in.dtype.itemsize      # double-buffered x
                         + K * g_in.dtype.itemsize            # double-buffered gumbel
                         + ed_out * np.dtype(out_dtype).itemsize)  # double-buffered out
    vmem_budget = 32 << 20
    tm_cap = max(8, min(tm_max, (vmem_budget // max(per_row_bytes, 1)) // 8 * 8))
    min_tiles = 2 if M >= 16 else 1
    num_tiles = max(pl.cdiv(M, tm_cap), min_tiles)
    tm = min(_round_up(pl.cdiv(M, num_tiles), 8), _round_up(M, 8))
    grid = (pl.cdiv(M, tm),)

    weight_bytes = (w_in.size * w_in.dtype.itemsize
                    + b_in.size * b_in.dtype.itemsize
                    + e_in.size * e_in.dtype.itemsize)
    vmem_limit = int(min(48 << 20,
                         max(16 << 20, 2 * (tm * per_row_bytes + 2 * weight_bytes))))

    out_flat = pl.pallas_call(
        _embedding_head_kernel,
        out_shape=jax.ShapeDtypeStruct((M, ed_out), out_dtype),
        grid_spec=pl.GridSpec(
            grid=grid,
            in_specs=[
                pl.BlockSpec((tm, input_dim), lambda i: (i, 0)),   # x rows
                pl.BlockSpec((tm, K), lambda i: (i, 0)),           # gumbel rows
                pl.BlockSpec((input_dim, K), lambda i: (0, 0)),    # fused W (resident)
                pl.BlockSpec((1, K), lambda i: (0, 0)),            # fused b (resident)
                pl.BlockSpec((K, ed_out), lambda i: (0, 0)),       # E (resident)
            ],
            out_specs=pl.BlockSpec((tm, ed_out), lambda i: (i, 0)),
        ),
        compiler_params=pltpu.CompilerParams(
            dimension_semantics=("parallel",),
            vmem_limit_bytes=vmem_limit),
    )(x_in, g_in, w_in, b_in, e_in)

    out = out_flat if ed_out == embedding_dim else out_flat[:, :embedding_dim]
    return out.reshape(B, nodes_num, embedding_dim)


def init_params(key, input_dim, K, embedding_dim):
    """Deterministic parameter init mirroring the PyTorch module's shapes."""
    k_e, k_w1, k_b1, k_w2, k_b2 = jax.random.split(key, 5)

    # E: xavier_uniform with gain=sqrt(2)
    gain = jnp.sqrt(2.0)
    bound_e = gain * jnp.sqrt(6.0 / (K + embedding_dim))
    E = jax.random.uniform(k_e, (K, embedding_dim), jnp.float32, -bound_e, bound_e)

    # Linear(input_dim, K): weights stored as (in, out) for row-major matmul
    bound1 = 1.0 / jnp.sqrt(input_dim)
    w1 = jax.random.uniform(k_w1, (input_dim, K), jnp.float32, -bound1, bound1)
    b1 = jax.random.uniform(k_b1, (K,), jnp.float32, -bound1, bound1)

    # Linear(K, K)
    bound2 = 1.0 / jnp.sqrt(K)
    w2 = jax.random.uniform(k_w2, (K, K), jnp.float32, -bound2, bound2)
    b2 = jax.random.uniform(k_b2, (K,), jnp.float32, -bound2, bound2)

    return E, w1, b1, w2, b2


if __name__ == "__main__":
    # Small shapes consistent with the module's forward:
    #   B=2, num_of_vertices=16, input_dim=32, K=16, embedding_dim=32
    B, N, input_dim, K, embedding_dim = 2, 16, 32, 16, 32

    key = jax.random.PRNGKey(0)
    k_x, k_param, k_gumbel = jax.random.split(key, 3)

    x = jax.random.normal(k_x, (B, N, input_dim), jnp.float32)
    E, w1, b1, w2, b2 = init_params(k_param, input_dim, K, embedding_dim)

    # Gumbel(0,1) noise for gumbel_softmax.  Fed to the kernel as bf16 (halves
    # the noise read stream); the reference uses the same rounded values so the
    # comparison stays apples-to-apples.
    gumbel = jax.random.gumbel(k_gumbel, (B, N, K), jnp.float32).astype(jnp.bfloat16)
    gumbel_f32 = gumbel.astype(jnp.float32)

    # Plain-JAX reference (unfused fc stack, exact softmax), as in the module.
    x2 = x.reshape(B, N, -1)
    h = x2 @ w1 + b1
    h = h @ w2 + b2
    c = jax.nn.softplus(h)
    d = jax.nn.softmax(c + gumbel_f32, axis=-1)
    ref = d @ E

    # 1) f32 kernel path.  Tolerance covers the W1·W2 pre-fusion and TPU's
    #    default (reduced-precision) f32 matmuls in both kernel and reference.
    out_f32 = embedding_head_forward(x, gumbel, w1, b1, w2, b2, E, nodes_num=N,
                                     use_bf16=False, out_dtype=jnp.float32)
    out_f32 = jax.block_until_ready(out_f32)
    assert out_f32.shape == (B, N, embedding_dim)
    assert jnp.allclose(out_f32, ref, atol=2e-2, rtol=2e-2)

    # 2) Default bf16 MXU path (x / W12 / E in bf16, f32 accumulation) with a
    #    bf16 output stream (halves writeback in the bandwidth-bound regime).
    out_bf16 = embedding_head_forward(x, gumbel, w1, b1, w2, b2, E, nodes_num=N,
                                      use_bf16=True, out_dtype=jnp.bfloat16)
    out_bf16 = jax.block_until_ready(out_bf16)
    assert out_bf16.shape == (B, N, embedding_dim)
    assert out_bf16.dtype == jnp.bfloat16
    assert jnp.allclose(out_bf16.astype(jnp.float32), ref, atol=5e-2, rtol=5e-2)

    print("KERNEL_OK")
</pallas_src>

<mosaic_0001>
module attributes {stable_mosaic.version = 11 : i64} {
  func.func @_embedding_head_kernel(%arg0: i32, %arg1: memref<16x32xf32, #tpu.memory_space<vmem>>, %arg2: memref<16x16xbf16, #tpu.memory_space<vmem>>, %arg3: memref<32x16xf32, #tpu.memory_space<vmem>>, %arg4: memref<1x16xf32, #tpu.memory_space<vmem>>, %arg5: memref<16x32xf32, #tpu.memory_space<vmem>>, %arg6: memref<16x32xf32, #tpu.memory_space<vmem>>) attributes {dimension_semantics = [#tpu.dimension_semantics<parallel>], iteration_bounds = array<i64: 2>, scalar_prefetch = 0 : i64, scratch_operands = 0 : i64, tpu.core_type = #tpu.core_type<tc>, window_params = [{transform_indices = @transform_0, window_bounds = array<i64: 16, 32>}, {transform_indices = @transform_1, window_bounds = array<i64: 16, 16>}, {pipeline_mode = #tpu.pipeline_mode<synchronous>, transform_indices = @transform_2, window_bounds = array<i64: 32, 16>}, {pipeline_mode = #tpu.pipeline_mode<synchronous>, transform_indices = @transform_3, window_bounds = array<i64: 1, 16>}, {pipeline_mode = #tpu.pipeline_mode<synchronous>, transform_indices = @transform_4, window_bounds = array<i64: 16, 32>}, {transform_indices = @transform_5, window_bounds = array<i64: 16, 32>}]} {
    %c0 = arith.constant 0 : index
    %c0_0 = arith.constant 0 : index
    %0 = vector.load %arg1[%c0, %c0_0] : memref<16x32xf32, #tpu.memory_space<vmem>>, vector<16x32xf32>
    %c0_1 = arith.constant 0 : index
    %c0_2 = arith.constant 0 : index
    %1 = vector.load %arg3[%c0_1, %c0_2] : memref<32x16xf32, #tpu.memory_space<vmem>>, vector<32x16xf32>
    %cst = arith.constant dense<0.000000e+00> : vector<16x16xf32>
    %2 = tpu.matmul %0, %1, %cst {dimension_numbers = #tpu.dot_dimension_numbers<[1], [0], [0], [1], [0, 0, 1, 1], [], []>} : vector<16x32xf32>, vector<32x16xf32>, vector<16x16xf32> -> vector<16x16xf32>
    %c0_3 = arith.constant 0 : index
    %c0_4 = arith.constant 0 : index
    %3 = vector.load %arg4[%c0_3, %c0_4] : memref<1x16xf32, #tpu.memory_space<vmem>>, vector<1x16xf32>
    %4 = vector.broadcast %3 : vector<1x16xf32> to vector<16x16xf32>
    %5 = arith.addf %2, %4 : vector<16x16xf32>
    %cst_5 = arith.constant 0.000000e+00 : f32
    %6 = vector.broadcast %cst_5 : f32 to vector<16x16xf32>
    %7 = arith.maximumf %5, %6 : vector<16x16xf32>
    %8 = math.absf %5 : vector<16x16xf32>
    %cst_6 = arith.constant 0.000000e+00 : f32
    %9 = vector.broadcast %cst_6 : f32 to vector<16x16xf32>
    %10 = arith.subf %9, %8 : vector<16x16xf32>
    %11 = math.exp %10 : vector<16x16xf32>
    %cst_7 = arith.constant 1.000000e+00 : f32
    %12 = vector.broadcast %cst_7 : f32 to vector<16x16xf32>
    %13 = arith.addf %12, %11 : vector<16x16xf32>
    %14 = math.log %13 : vector<16x16xf32>
    %15 = arith.addf %7, %14 : vector<16x16xf32>
    %c0_8 = arith.constant 0 : index
    %c0_9 = arith.constant 0 : index
    %16 = vector.load %arg2[%c0_8, %c0_9] : memref<16x16xbf16, #tpu.memory_space<vmem>>, vector<16x16xbf16>
    %17 = arith.extf %16 : vector<16x16xbf16> to vector<16x16xf32>
    %18 = arith.addf %15, %17 : vector<16x16xf32>
    %cst_10 = arith.constant dense<0xFF800000> : vector<16xf32>
    %19 = vector.multi_reduction <maximumf>, %18, %cst_10 [1] : vector<16x16xf32> to vector<16xf32>
    %20 = vector.shape_cast %19 : vector<16xf32> to vector<16x1xf32>
    %21 = vector.broadcast %20 : vector<16x1xf32> to vector<16x16xf32>
    %22 = arith.subf %18, %21 : vector<16x16xf32>
    %23 = math.exp %22 : vector<16x16xf32>
    %cst_11 = arith.constant dense<0.000000e+00> : vector<16xf32>
    %24 = vector.multi_reduction <add>, %23, %cst_11 [1] : vector<16x16xf32> to vector<16xf32>
    %25 = vector.shape_cast %24 : vector<16xf32> to vector<16x1xf32>
    %26 = vector.broadcast %25 : vector<16x1xf32> to vector<16x16xf32>
    %27 = arith.divf %23, %26 : vector<16x16xf32>
    %c0_12 = arith.constant 0 : index
    %c0_13 = arith.constant 0 : index
    %28 = vector.load %arg5[%c0_12, %c0_13] : memref<16x32xf32, #tpu.memory_space<vmem>>, vector<16x32xf32>
    %cst_14 = arith.constant dense<0.000000e+00> : vector<16x32xf32>
    %29 = tpu.matmul %27, %28, %cst_14 {dimension_numbers = #tpu.dot_dimension_numbers<[1], [0], [0], [1], [0, 0, 1, 1], [], []>} : vector<16x16xf32>, vector<16x32xf32>, vector<16x32xf32> -> vector<16x32xf32>
    %c0_15 = arith.constant 0 : index
    %c0_16 = arith.constant 0 : index
    %30 = vector.load %arg6[%c0_15, %c0_16] : memref<16x32xf32, #tpu.memory_space<vmem>>, vector<16x32xf32>
    tpu.vector_store %arg6[%c0_15, %c0_16], %29 {strides = array<i32>} : memref<16x32xf32, #tpu.memory_space<vmem>>, vector<16x32xf32>,
    return
  }
  func.func @transform_0(%arg0: i32) -> (i32, i32) {
    %c0_i32 = arith.constant 0 : i32
    %c0_i32_0 = arith.constant 0 : i32
    return %arg0, %c0_i32 : i32, i32
  }
  func.func @transform_1(%arg0: i32) -> (i32, i32) {
    %c0_i32 = arith.constant 0 : i32
    %c0_i32_0 = arith.constant 0 : i32
    return %arg0, %c0_i32 : i32, i32
  }
  func.func @transform_2(%arg0: i32) -> (i32, i32) {
    %c0_i32 = arith.constant 0 : i32
    %c0_i32_0 = arith.constant 0 : i32
    %c0_i32_1 = arith.constant 0 : i32
    return %c0_i32, %c0_i32_0 : i32, i32
  }
  func.func @transform_3(%arg0: i32) -> (i32, i32) {
    %c0_i32 = arith.constant 0 : i32
    %c0_i32_0 = arith.constant 0 : i32
    %c0_i32_1 = arith.constant 0 : i32
    return %c0_i32, %c0_i32_0 : i32, i32
  }
  func.func @transform_4(%arg0: i32) -> (i32, i32) {
    %c0_i32 = arith.constant 0 : i32
    %c0_i32_0 = arith.constant 0 : i32
    %c0_i32_1 = arith.constant 0 : i32
    return %c0_i32, %c0_i32_0 : i32, i32
  }
  func.func @transform_5(%arg0: i32) -> (i32, i32) {
    %c0_i32 = arith.constant 0 : i32
    %c0_i32_0 = arith.constant 0 : i32
    return %arg0, %c0_i32 : i32, i32
  }
}

</mosaic_0001>

<llo_original>
// kernel: tpu_custom_call.1
$region0: #{tpu_custom_call.1}
  #allocation0 [shape = 'u32[]', space=smem, size = 0x4, offset = 0x4, fixed_abs, tag = 'smem constant byte address 0x4 - core index']
  #allocation1 [shape = 'u32[144,128]{1,0:T(1,128)}', space=vmem, size = 0x12000, scoped, tag = 'internal scratch']
  %s0 = inlined_call_operand.vmem [shape: f32[32,32], index: 0, kind: input, shape index: {}]
  %s1 = inlined_call_operand.vmem [shape: bf16[32,16], index: 1, kind: input, shape index: {}]
  %s2 = inlined_call_operand.vmem [shape: f32[32,16], index: 2, kind: input, shape index: {}]
  %s3 = inlined_call_operand.vmem [shape: f32[1,16], index: 3, kind: input, shape index: {}]
  %s4 = inlined_call_operand.vmem [shape: f32[16,32], index: 4, kind: input, shape index: {}]
  %s5 = inlined_call_operand.hbm [shape: f32[32,32], index: 5, kind: output, shape index: {}]
  %s6 = sld [smem:[#allocation0]]
  $region53: #{tpu_custom_call.1} parent=0
    _
  %s8 = ssub.s32 1, %s6
  %s9 = scalar_select 0, %s8, %s6
  $region1: #{tpu_custom_call.1} parent=0
    #allocation2 [shape = 'u8[16384]{0}', space=vmem, size = 0x4000, scoped, tag = 'output window, operand 0']
    #allocation3 [shape = 's32[2]{0}', space=sflag, size = 0x8, scoped, tag = 'scoped memory for tpu_custom_call.1']
    %10 = vsyncpa [#allocation3], 0
    %s11 = scalar_lea.sflag [#allocation3], 1
    %12 = vsyncpa %s11, 0
    loop: start=0, step=1, limit=4
    $region2: #{tpu_custom_call.1} parent=1 // loop_pre_header
      _
    $region3: #{tpu_custom_call.1} parent=1 // loop_header
      %s14 = sphi 0, %s18
      %p15 = scmp.ge.s32.totalorder %s14, 4
      %s24 = sphi 0, %s26
      %s27 = sphi 0, %s24
      %s28 = sphi 0, %s27
      %s44 = sphi 0, %s28
      %s50 = sphi 0, %s52
      %s53 = sphi 0, %s50
      %s54 = sphi 0, %s53
      %s70 = sphi 0, %s54
      %s74 = sphi 0, %s74
      %s76 = sphi 0, %s74
      %s77 = sphi 0, %s76
      %s91 = sphi 0, %s77
      %s95 = sphi 0, %s95
      %s97 = sphi 0, %s95
      %s98 = sphi 0, %s97
      %s112 = sphi 0, %s98
      %s116 = sphi 0, %s116
      %s118 = sphi 0, %s116
      %s119 = sphi 0, %s118
      %s133 = sphi 0, %s119
      %s139 = sphi 0, %s141
      %s142 = sphi 0, %s139
      %s143 = sphi 0, %s142
      %s159 = sphi 0, %s143
    $region4: #{tpu_custom_call.1} parent=1 // loop_header_branch
      %17 = sbr.rel (%p15) target = $region8
    $region5: #{tpu_custom_call.1} parent=1 // loop_body
      %s19 = ssub.s32 %s14, 1
      %s20 = ssub.s32 %s14, 2
      %s21 = sadd.s32 %s14, 1
      %s22 = ssub.s32 %s14, %s21
      %p23 = scmp.eq.s32.totalorder %s22, 0
      %s25 = sadd.s32 %s24, 1
      %s26 = scalar_select %p23, %s24, %s25
      %p29 = pneg %p23
      %p30 = scmp.eq.s32.totalorder %s14, 1
      %p31 = por %p29, %p30
      %p32 = scmp.ne.s32.totalorder %s24, %s27
      %p33 = scmp.eq.s32.totalorder %s14, 0
      %p34 = por %p32, %p33
      %p35 = scmp.ne.s32.totalorder %s24, %s27
      %p36 = scmp.eq.s32.totalorder %s19, 1
      %p37 = por %p35, %p36
      %p38 = scmp.ne.s32.totalorder %s27, %s28
      %p39 = scmp.eq.s32.totalorder %s19, 0
      %p40 = por %p38, %p39
      %p41 = scmp.ne.s32.totalorder %s27, %s28
      %p42 = scmp.eq.s32.totalorder %s20, 1
      %p43 = por %p41, %p42
      %p45 = scmp.ne.s32.totalorder %s28, %s44
      %p46 = scmp.eq.s32.totalorder %s20, 0
      %p47 = por %p45, %p46
      %s48 = ssub.s32 %s14, %s21
      %p49 = scmp.eq.s32.totalorder %s48, 0
      %s51 = sadd.s32 %s50, 1
      %s52 = scalar_select %p49, %s50, %s51
      %p55 = pneg %p49
      %p56 = scmp.eq.s32.totalorder %s14, 1
      %p57 = por %p55, %p56
      %p58 = scmp.ne.s32.totalorder %s50, %s53
      %p59 = scmp.eq.s32.totalorder %s14, 0
      %p60 = por %p58, %p59
      %p61 = scmp.ne.s32.totalorder %s50, %s53
      %p62 = scmp.eq.s32.totalorder %s19, 1
      %p63 = por %p61, %p62
      %p64 = scmp.ne.s32.totalorder %s53, %s54
      %p65 = scmp.eq.s32.totalorder %s19, 0
      %p66 = por %p64, %p65
      %p67 = scmp.ne.s32.totalorder %s53, %s54
      %p68 = scmp.eq.s32.totalorder %s20, 1
      %p69 = por %p67, %p68
      %p71 = scmp.ne.s32.totalorder %s54, %s70
      %p72 = scmp.eq.s32.totalorder %s20, 0
      %p73 = por %p71, %p72
      %s75 = sadd.s32 %s74, 1
      %p78 = scmp.eq.s32.totalorder %s14, 1
      %p79 = scmp.ne.s32.totalorder %s74, %s76
      %p80 = scmp.eq.s32.totalorder %s14, 0
      %p81 = por %p79, %p80
      %p82 = scmp.ne.s32.totalorder %s74, %s76
      %p83 = scmp.eq.s32.totalorder %s19, 1
      %p84 = por %p82, %p83
      %p85 = scmp.ne.s32.totalorder %s76, %s77
      %p86 = scmp.eq.s32.totalorder %s19, 0
      %p87 = por %p85, %p86
      %p88 = scmp.ne.s32.totalorder %s76, %s77
      %p89 = scmp.eq.s32.totalorder %s20, 1
      %p90 = por %p88, %p89
      %p92 = scmp.ne.s32.totalorder %s77, %s91
      %p93 = scmp.eq.s32.totalorder %s20, 0
      %p94 = por %p92, %p93
      %s96 = sadd.s32 %s95, 1
      %p99 = scmp.eq.s32.totalorder %s14, 1
      %p100 = scmp.ne.s32.totalorder %s95, %s97
      %p101 = scmp.eq.s32.totalorder %s14, 0
      %p102 = por %p100, %p101
      %p103 = scmp.ne.s32.totalorder %s95, %s97
      %p104 = scmp.eq.s32.totalorder %s19, 1
      %p105 = por %p103, %p104
      %p106 = scmp.ne.s32.totalorder %s97, %s98
      %p107 = scmp.eq.s32.totalorder %s19, 0
      %p108 = por %p106, %p107
      %p109 = scmp.ne.s32.totalorder %s97, %s98
      %p110 = scmp.eq.s32.totalorder %s20, 1
      %p111 = por %p109, %p110
      %p113 = scmp.ne.s32.totalorder %s98, %s112
      %p114 = scmp.eq.s32.totalorder %s20, 0
      %p115 = por %p113, %p114
      %s117 = sadd.s32 %s116, 1
      %p120 = scmp.eq.s32.totalorder %s14, 1
      %p121 = scmp.ne.s32.totalorder %s116, %s118
      %p122 = scmp.eq.s32.totalorder %s14, 0
      %p123 = por %p121, %p122
      %p124 = scmp.ne.s32.totalorder %s116, %s118
      %p125 = scmp.eq.s32.totalorder %s19, 1
      %p126 = por %p124, %p125
      %p127 = scmp.ne.s32.totalorder %s118, %s119
      %p128 = scmp.eq.s32.totalorder %s19, 0
      %p129 = por %p127, %p128
      %p130 = scmp.ne.s32.totalorder %s118, %s119
      %p131 = scmp.eq.s32.totalorder %s20, 1
      %p132 = por %p130, %p131
      %p134 = scmp.ne.s32.totalorder %s119, %s133
      %p135 = scmp.eq.s32.totalorder %s20, 0
      %p136 = por %p134, %p135
      %s137 = ssub.s32 %s14, %s21
      %p138 = scmp.eq.s32.totalorder %s137, 0
      %s140 = sadd.s32 %s139, 1
      %s141 = scalar_select %p138, %s139, %s140
      %p144 = pneg %p138
      %p145 = scmp.eq.s32.totalorder %s14, 1
      %p146 = por %p144, %p145
      %p147 = scmp.ne.s32.totalorder %s139, %s142
      %p148 = scmp.eq.s32.totalorder %s14, 0
      %p149 = por %p147, %p148
      %p150 = scmp.ne.s32.totalorder %s139, %s142
      %p151 = scmp.eq.s32.totalorder %s19, 1
      %p152 = por %p150, %p151
      %p153 = scmp.ne.s32.totalorder %s142, %s143
      %p154 = scmp.eq.s32.totalorder %s19, 0
      %p155 = por %p153, %p154
      %p156 = scmp.ne.s32.totalorder %s142, %s143
      %p157 = scmp.eq.s32.totalorder %s20, 1
      %p158 = por %p156, %p157
      %p160 = scmp.ne.s32.totalorder %s143, %s159
      %p161 = scmp.eq.s32.totalorder %s20, 0
      %p162 = por %p160, %p161
      %p163 = scmp.le.s32.totalorder 1, %s14
      %p164 = scmp.lt.s32.totalorder %s14, 3
      %p165 = pnand %p163, %p164
      %p166 = pneg %p165
      // Predicated region
      $region9: #{tpu_custom_call.1} parent=5 // pred_check
        _
      $region10: #{tpu_custom_call.1} parent=5 // pred_check_branch
        %168 = sbr.rel (%p165) target = $region12
      $region11: #{tpu_custom_call.1} parent=5 // pred_region
        %s169 = ssub.s32 %s14, 1
        // Predicated region
        $region13: #{tpu_custom_call.1} parent=11 // pred_check
          %p170 = pneg %p87
        $region14: #{tpu_custom_call.1} parent=11 // pred_check_branch
          %172 = sbr.rel (%p170) target = $region16
        $region15: #{tpu_custom_call.1} parent=11 // pred_region
          _
        $region16: #{tpu_custom_call.1} parent=11 // pred_fallthru
          _
        // Predicated region
        $region17: #{tpu_custom_call.1} parent=11 // pred_check
          %p173 = pneg %p108
        $region18: #{tpu_custom_call.1} parent=11 // pred_check_branch
          %175 = sbr.rel (%p173) target = $region20
        $region19: #{tpu_custom_call.1} parent=11 // pred_region
          _
        $region20: #{tpu_custom_call.1} parent=11 // pred_fallthru
          _
        // Predicated region
        $region21: #{tpu_custom_call.1} parent=11 // pred_check
          %p176 = pneg %p129
        $region22: #{tpu_custom_call.1} parent=11 // pred_check_branch
          %178 = sbr.rel (%p176) target = $region24
        $region23: #{tpu_custom_call.1} parent=11 // pred_region
          _
        $region24: #{tpu_custom_call.1} parent=11 // pred_fallthru
          _
      $region12: #{tpu_custom_call.1} parent=5 // pred_fallthru
        _
      %p179 = scmp.lt.s32.totalorder %s14, 2
      // Predicated region
      $region25: #{tpu_custom_call.1} parent=5 // pred_check
        %p180 = pneg %p179
      $region26: #{tpu_custom_call.1} parent=5 // pred_check_branch
        %182 = sbr.rel (%p180) target = $region28
      $region27: #{tpu_custom_call.1} parent=5 // pred_region
        // Predicated region
        $region29: #{tpu_custom_call.1} parent=27 // pred_check
          %p183 = pneg %p34
        $region30: #{tpu_custom_call.1} parent=27 // pred_check_branch
          %185 = sbr.rel (%p183) target = $region32
        $region31: #{tpu_custom_call.1} parent=27 // pred_region
          %s186 = smul.u32 2, %s14
          %p187 = scmp.lt.s32.totalorder %s186, 3
          %s188 = scalar_select %p187, %s186, 3
          %s189 = smul.addr %s188, 8
          %s190 = scalar_lea.vmem %s0, %s189
          %s191 = smul.u32 2, %s14
        $region32: #{tpu_custom_call.1} parent=27 // pred_fallthru
          _
        // Predicated region
        $region33: #{tpu_custom_call.1} parent=27 // pred_check
          %p192 = pneg %p60
        $region34: #{tpu_custom_call.1} parent=27 // pred_check_branch
          %194 = sbr.rel (%p192) target = $region36
        $region35: #{tpu_custom_call.1} parent=27 // pred_region
          %s195 = smul.u32 2, %s14
          %p196 = scmp.lt.s32.totalorder %s195, 3
          %s197 = scalar_select %p196, %s195, 3
          %s198 = smul.addr %s197, 4
          %s199 = scalar_lea.vmem %s1, %s198
          %s200 = smul.u32 2, %s14
        $region36: #{tpu_custom_call.1} parent=27 // pred_fallthru
          _
      $region28: #{tpu_custom_call.1} parent=5 // pred_fallthru
        _
      %p201 = scmp.le.s32.totalorder 1, %s14
      %p202 = scmp.lt.s32.totalorder %s14, 3
      %p203 = pnand %p201, %p202
      %p204 = pneg %p203
      // Predicated region
      $region37: #{tpu_custom_call.1} parent=5 // pred_check
        _
      $region38: #{tpu_custom_call.1} parent=5 // pred_check_branch
        %206 = sbr.rel (%p203) target = $region40
      $region39: #{tpu_custom_call.1} parent=5 // pred_region
        %s207 = ssub.s32 %s14, 1
        %s208 = smul.u32 2, %s19
        %p209 = scmp.lt.s32.totalorder %s208, 3
        %s210 = scalar_select %p209, %s208, 3
        %s211 = smul.addr %s210, 8
        %s212 = scalar_lea.vmem %s0, %s211
        %p213 = pneg %p40
        %p214 = pneg %p37
        %s215 = smul.u32 2, %s19
        %p216 = scmp.lt.s32.totalorder %s215, 3
        %s217 = scalar_select %p216, %s215, 3
        %s218 = smul.addr %s217, 4
        %s219 = scalar_lea.vmem %s1, %s218
        %p220 = pneg %p66
        %p221 = pneg %p63
        %p222 = pneg %p87
        %p223 = pneg %p84
        %p224 = pneg %p108
        %p225 = pneg %p105
        %p226 = pneg %p129
        %p227 = pneg %p126
        %p228 = pneg %p155
        %p229 = pneg %p152
        %s230 = sand.u32 %s142, 1
        %s231 = scalar_lea.sflag [#allocation3], %s230
        %s232 = sand.u32 %s142, 1
        %s233 = smul.addr %s232, 16
        %s234 = scalar_lea.vmem [#allocation2], %s233
        %s235 = smul.u32 2, %s19
        %p236 = scmp.lt.s32.totalorder %s235, 3
        %s237 = scalar_select %p236, %s235, 3
        %s238 = smul.addr %s237, 8
        %s239 = scalar_lea.vmem %s0, %s238
        %s240 = smul.u32 2, %s19
        %s241 = smul.u32 2, %s19
        %p242 = scmp.lt.s32.totalorder %s241, 3
        %s243 = scalar_select %p242, %s241, 3
        %s244 = smul.addr %s243, 4
        %s245 = scalar_lea.vmem %s1, %s244
        %s246 = smul.u32 2, %s19
        %s247 = smul.u32 2, %s19
        %v248 = vld [vmem:[%s239] sm:$0xff]
        %v249 = vld [vmem:[%s239 + $0x8] sm:$0xff]
        %v250 = vld [vmem:[%s2] sm:$0xff]
        %v251 = vld [vmem:[%s2 + $0x8] sm:$0xff]
        %v252 = vld [vmem:[%s2 + $0x10] sm:$0xff]
        %v253 = vld [vmem:[%s2 + $0x18] sm:$0xff]
        %v254 = vld [vmem:[%s3] sm:$0x1]
        %v256 = vlaneseq
        %v257 = vshrl.u32 %v256, 7
        %v258 = vsub.s32 0, %v257
        %v259 = vrot.slane %v254, %v258
        %vm261 = vcmask 261120
        %v263 = vsel %vm261, %v248, 0
        %v266 = vsel %vm261, %v249, 0
        %268 = vmatprep.subr.mxu0 0.0
        %269 = vmatpush1.msra.mxu0 %v250
        %270 = vmatprep.subr.mxu0 0.0
        %271 = vmatpush1.msra.mxu0 %v251
        %272 = vmatprep.subr.mxu0 0.0
        %273 = vmatpush1.msra.mxu0 %v252
        %274 = vmatprep.subr.mxu0 0.0
        %275 = vmatpush1.msra.mxu0 %v253
        %276 = vmatprep.subr.mxu0 0.0
        %277 = vmatpush1.msra.mxu0 0.0
        %278 = vmatprep.subr.mxu0 0.0
        %279 = vmatpush1.msra.mxu0 0.0
        %280 = vmatprep.subr.mxu0 0.0
        %281 = vmatpush1.msra.mxu0 0.0
        %282 = vmatprep.subr.mxu0 0.0
        %283 = vmatpush1.msra.mxu0 0.0
        %284 = vmatprep.subr.mxu0 0.0
        %285 = vmatpush1.msra.mxu0 0.0
        %286 = vmatprep.subr.mxu0 0.0
        %287 = vmatpush1.msra.mxu0 0.0
        %288 = vmatprep.subr.mxu0 0.0
        %289 = vmatpush1.msra.mxu0 0.0
        %290 = vmatprep.subr.mxu0 0.0
        %291 = vmatpush1.msra.mxu0 0.0
        %292 = vmatprep.subr.mxu0 0.0
        %293 = vmatpush1.msra.mxu0 0.0
        %294 = vmatprep.subr.mxu0 0.0
        %295 = vmatpush1.msra.mxu0 0.0
        %296 = vmatprep.subr.mxu0 0.0
        %297 = vmatpush1.msra.mxu0 0.0
        %298 = vmatprep.subr.mxu0 0.0
        %299 = vmatpush1.msra.mxu0 0.0
        %300 = vmatprep.subr.mxu0 0.0
        %301 = vmatpush1.msra.mxu0 0.0
        %302 = vmatprep.subr.mxu0 0.0
        %303 = vmatpush1.msra.mxu0 0.0
        %304 = vmatprep.subr.mxu0 0.0
        %305 = vmatpush1.msra.mxu0 0.0
        %306 = vmatprep.subr.mxu0 0.0
        %307 = vmatpush1.msra.mxu0 0.0
        %308 = vmatprep.subr.mxu0 0.0
        %309 = vmatpush1.msra.mxu0 0.0
        %310 = vmatprep.subr.mxu0 0.0
        %311 = vmatpush1.msra.mxu0 0.0
        %312 = vmatprep.subr.mxu0 0.0
        %313 = vmatpush1.msra.mxu0 0.0
        %314 = vmatprep.subr.mxu0 0.0
        %315 = vmatpush1.msra.mxu0 0.0
        %316 = vmatprep.subr.mxu0 0.0
        %317 = vmatpush1.msra.mxu0 0.0
        %318 = vmatprep.subr.mxu0 0.0
        %319 = vmatpush1.msra.mxu0 0.0
        %320 = vmatprep.subr.mxu0 0.0
        %321 = vmatpush1.msra.mxu0 0.0
        %322 = vmatprep.subr.mxu0 0.0
        %323 = vmatpush1.msra.mxu0 0.0
        %324 = vmatprep.subr.mxu0 0.0
        %325 = vmatpush1.msra.mxu0 0.0
        %326 = vmatprep.subr.mxu0 0.0
        %327 = vmatpush1.msra.mxu0 0.0
        %328 = vmatprep.subr.mxu0 0.0
        %329 = vmatpush1.msra.mxu0 0.0
        %330 = vmatprep.subr.mxu0 0.0
        %331 = vmatpush1.msra.mxu0 0.0
        %332 = vmatprep.mubr.f32.mxu0 0.0
        %333 = vmatmul.mubr.f32.gmra.mrb[0].mxu0 %v263
        %v334 = vpop.f32.mrb[0].mxu0
        %v335 = vadd.f32 %v259, %v334
        %v336 = vpop.f32.mrb[0].mxu0
        %337 = vmatprep.mubr.f32.mxu0 0.0
        %338 = vmatmul.mubr.f32.gmra.mrb[0].mxu0 %v266
        %v339 = vpop.f32.mrb[0].mxu0
        %v340 = vadd.f32 %v259, %v339
        %v341 = vpop.f32.mrb[0].mxu0
        %342 = vdwg.mxu0
        %v343 = vmax.f32 %v335, 0.0
        %v344 = vmax.f32 %v340, 0.0
        %v345 = vand.u32 2147483647, %v335
        %v346 = vand.u32 2147483647, %v340
        %v347 = vsub.f32 0.0, %v345
        %v348 = vsub.f32 0.0, %v346
        %v349 = vmul.f32 %v347, 1.442695
        %v350 = vpow.pop %v349
        %v351 = vmul.f32 %v348, 1.442695
        %v352 = vpow.pop %v351
        %v353 = vadd.f32 %v350, 1.0
        %v354 = vadd.f32 %v352, 1.0
        %v355 = vlog2.pop %v353
        %v356 = vmul.f32 %v355, 0.6931472
        %v357 = vlog2.pop %v354
        %v358 = vmul.f32 %v357, 0.6931472
        %v359 = vadd.f32 %v343, %v356
        %v360 = vadd.f32 %v344, %v358
        %v361 = vld [vmem:[%s245] sm:$0xf]
        %v362 = vld [vmem:[%s245 + $0x4] sm:$0xf]
        %v363 = vunpack.c.l.bf16 %v361
        %v364 = vunpack.c.l.bf16 %v362
        %v365 = vadd.f32 %v359, %v363
        %v366 = vadd.f32 %v360, %v364
        %vm367 = vcmask 130048
        %v368 = vsel %vm367, %v365, -inf
        %369 = vmax.xlane.f32.xlu0 %v368
        %v370 = vpop.xlane.xlu0 %369
        %v371 = vsel %vm367, %v366, -inf
        %372 = vmax.xlane.f32.xlu0 %v371
        %v373 = vpop.xlane.xlu0 %372
        %v374 = vsub.f32 %v365, %v370
        %v375 = vsub.f32 %v366, %v373
        %v376 = vmul.f32 %v374, 1.442695
        %v377 = vpow.pop %v376
        %v378 = vmul.f32 %v375, 1.442695
        %v379 = vpow.pop %v378
        %v380 = vsel %vm367, %v377, 0.0
        %381 = vadd.xlane.f32.xlu0 %v380
        %v382 = vpop.xlane.xlu0 %381
        %v383 = vsel %vm367, %v379, 0.0
        %384 = vadd.xlane.f32.xlu0 %v383
        %v385 = vpop.xlane.xlu0 %384
        %v386 = vrcp.pop %v382
        %v387 = vmul.f32 %v377, %v386
        %v388 = vrcp.pop %v385
        %v389 = vmul.f32 %v379, %v388
        %v390 = vld [vmem:[%s4] sm:$0xff]
        %v391 = vld [vmem:[%s4 + $0x8] sm:$0xff]
        %v393 = vsel %vm367, %v387, 0
        %v396 = vsel %vm367, %v389, 0
        %398 = vmatprep.subr.mxu0 0.0
        %399 = vmatpush1.msra.mxu0 %v390
        %400 = vmatprep.subr.mxu0 0.0
        %401 = vmatpush1.msra.mxu0 %v391
        %402 = vmatprep.subr.mxu0 0.0
        %403 = vmatpush1.msra.mxu0 0.0
        %404 = vmatprep.subr.mxu0 0.0
        %405 = vmatpush1.msra.mxu0 0.0
        %406 = vmatprep.subr.mxu0 0.0
        %407 = vmatpush1.msra.mxu0 0.0
        %408 = vmatprep.subr.mxu0 0.0
        %409 = vmatpush1.msra.mxu0 0.0
        %410 = vmatprep.subr.mxu0 0.0
        %411 = vmatpush1.msra.mxu0 0.0
        %412 = vmatprep.subr.mxu0 0.0
        %413 = vmatpush1.msra.mxu0 0.0
        %414 = vmatprep.subr.mxu0 0.0
        %415 = vmatpush1.msra.mxu0 0.0
        %416 = vmatprep.subr.mxu0 0.0
        %417 = vmatpush1.msra.mxu0 0.0
        %418 = vmatprep.subr.mxu0 0.0
        %419 = vmatpush1.msra.mxu0 0.0
        %420 = vmatprep.subr.mxu0 0.0
        %421 = vmatpush1.msra.mxu0 0.0
        %422 = vmatprep.subr.mxu0 0.0
        %423 = vmatpush1.msra.mxu0 0.0
        %424 = vmatprep.subr.mxu0 0.0
        %425 = vmatpush1.msra.mxu0 0.0
        %426 = vmatprep.subr.mxu0 0.0
        %427 = vmatpush1.msra.mxu0 0.0
        %428 = vmatprep.subr.mxu0 0.0
        %429 = vmatpush1.msra.mxu0 0.0
        %430 = vmatprep.subr.mxu0 0.0
        %431 = vmatpush1.msra.mxu0 0.0
        %432 = vmatprep.subr.mxu0 0.0
        %433 = vmatpush1.msra.mxu0 0.0
        %434 = vmatprep.subr.mxu0 0.0
        %435 = vmatpush1.msra.mxu0 0.0
        %436 = vmatprep.subr.mxu0 0.0
        %437 = vmatpush1.msra.mxu0 0.0
        %438 = vmatprep.subr.mxu0 0.0
        %439 = vmatpush1.msra.mxu0 0.0
        %440 = vmatprep.subr.mxu0 0.0
        %441 = vmatpush1.msra.mxu0 0.0
        %442 = vmatprep.subr.mxu0 0.0
        %443 = vmatpush1.msra.mxu0 0.0
        %444 = vmatprep.subr.mxu0 0.0
        %445 = vmatpush1.msra.mxu0 0.0
        %446 = vmatprep.subr.mxu0 0.0
        %447 = vmatpush1.msra.mxu0 0.0
        %448 = vmatprep.subr.mxu0 0.0
        %449 = vmatpush1.msra.mxu0 0.0
        %450 = vmatprep.subr.mxu0 0.0
        %451 = vmatpush1.msra.mxu0 0.0
        %452 = vmatprep.subr.mxu0 0.0
        %453 = vmatpush1.msra.mxu0 0.0
        %454 = vmatprep.subr.mxu0 0.0
        %455 = vmatpush1.msra.mxu0 0.0
        %456 = vmatprep.subr.mxu0 0.0
        %457 = vmatpush1.msra.mxu0 0.0
        %458 = vmatprep.subr.mxu0 0.0
        %459 = vmatpush1.msra.mxu0 0.0
        %460 = vmatprep.subr.mxu0 0.0
        %461 = vmatpush1.msra.mxu0 0.0
        %462 = vmatprep.mubr.f32.mxu0 0.0
        %463 = vmatmul.mubr.f32.gmra.mrb[0].mxu0 %v393
        %v464 = vpop.f32.mrb[0].mxu0
        %v465 = vadd.f32 0.0, %v464
        %v466 = vpop.f32.mrb[0].mxu0
        %467 = vmatprep.mubr.f32.mxu0 0.0
        %468 = vmatmul.mubr.f32.gmra.mrb[0].mxu0 %v396
        %v469 = vpop.f32.mrb[0].mxu0
        %v470 = vadd.f32 0.0, %v469
        %v471 = vpop.f32.mrb[0].mxu0
        %472 = vdwg.mxu0
        %473 = vst.msk [vmem:[%s234] sm:$0xff] %vm261, %v465
        %474 = vst.msk [vmem:[%s234 + $0x8] sm:$0xff] %vm261, %v470
        %s475 = sand.u32 %s142, 1
        %s476 = scalar_lea.sflag [#allocation3], %s475
        %s477 = sand.u32 %s142, 1
        %s478 = smul.addr %s477, 16
        %s479 = scalar_lea.vmem [#allocation2], %s478
        // Predicated region
        $region41: #{tpu_custom_call.1} parent=39 // pred_check
          %p480 = pneg %p152
        $region42: #{tpu_custom_call.1} parent=39 // pred_check_branch
          %482 = sbr.rel (%p480) target = $region44
        $region43: #{tpu_custom_call.1} parent=39 // pred_region
          %s483 = smul.u32 2, %s19
          %s485 = ssub.s32 256, 256
          %486 = vsyncadd %s476, %s485
          %s487 = smul.addr %s483, 128
          %s488 = scalar_lea.hbm %s5, %s487
          %s489 = sshll.u32 %s479, 4
          %s490 = int_to_ptr.vmem [resolvable:$true] %s489
          %495 = dma.vmem_to_hbm [thread:$0]  %s490, 256, %s488, %s476, 128, 128, 8
        $region44: #{tpu_custom_call.1} parent=39 // pred_fallthru
          _
      $region40: #{tpu_custom_call.1} parent=5 // pred_fallthru
        _
      %p496 = scmp.le.s32.totalorder 2, %s14
      // Predicated region
      $region45: #{tpu_custom_call.1} parent=5 // pred_check
        %p497 = pneg %p496
      $region46: #{tpu_custom_call.1} parent=5 // pred_check_branch
        %499 = sbr.rel (%p497) target = $region48
      $region47: #{tpu_custom_call.1} parent=5 // pred_region
        %s500 = ssub.s32 %s14, 2
        // Predicated region
        $region49: #{tpu_custom_call.1} parent=47 // pred_check
          %p501 = pneg %p158
        $region50: #{tpu_custom_call.1} parent=47 // pred_check_branch
          %503 = sbr.rel (%p501) target = $region52
        $region51: #{tpu_custom_call.1} parent=47 // pred_region
          %s504 = sand.u32 %s143, 1
          %s505 = scalar_lea.sflag [#allocation3], %s504
          %s506 = sand.u32 %s143, 1
          %s507 = smul.addr %s506, 16
          %s508 = scalar_lea.vmem [#allocation2], %s507
          %509 = dma.done %s505, 256
        $region52: #{tpu_custom_call.1} parent=47 // pred_fallthru
          _
      $region48: #{tpu_custom_call.1} parent=5 // pred_fallthru
        _
    $region6: #{tpu_custom_call.1} parent=1 // loop_footer
      %s18 = sadd.s32 1, %s14
    $region7: #{tpu_custom_call.1} parent=1 // loop_footer_branch
      %13 = sbr.rel target = $region3
    $region8: #{tpu_custom_call.1} parent=1 // loop_exit
      _
    %510 = vsyncpa [#allocation3], 1
    %s511 = scalar_lea.sflag [#allocation3], 1
    %512 = vsyncpa %s511, 1

</llo_original>
